<compile_context>
chip_gen: v5e
topology: v5e:2x2
jax: 0.10.0
libtpu: 0.0.40
codegen_flags: <defaults>
</compile_context>

<pallas_src>
import jax
import jax.numpy as jnp
from jax import lax
from jax.experimental import pallas as pl
from jax.experimental.pallas import tpu as pltpu

OBS_DIM = 4          # CartPole-v1 observation_space.shape[0]
N_ACTIONS = 2        # CartPole-v1 action_space.n
HIDDEN_SIZE1 = 64
HIDDEN_SIZE2 = 32
NOUT = N_ACTIONS + 1  # merged head output: [policy logits | value]


def ppo_fused_kernel(x_ref, w1_ref, b1_ref, wh_ref, bh_ref, out_ref):
    # layer1 + ReLU
    x = x_ref[...]                                                    # (tb, OBS)
    h1 = jnp.dot(x, w1_ref[...], preferred_element_type=jnp.float32) + b1_ref[...]
    h1 = jnp.maximum(h1, 0.0)                                         # (tb, H1)

    # fused layer2 + (policy head | value head): one matmul, (tb, NOUT)
    fused = jnp.dot(h1, wh_ref[...], preferred_element_type=jnp.float32) + bh_ref[...]

    # softmax over the first N_ACTIONS lanes only; pass the value lane through.
    col = lax.broadcasted_iota(jnp.int32, fused.shape, dimension=1)
    is_policy = col < N_ACTIONS
    masked = jnp.where(is_policy, fused, -jnp.inf)
    m = jnp.max(masked, axis=-1, keepdims=True)
    e = jnp.where(is_policy, jnp.exp(jnp.where(is_policy, fused - m, 0.0)), 0.0)
    inv_denom = pl.reciprocal(jnp.sum(e, axis=-1, keepdims=True), approx=True)
    out_ref[...] = jnp.where(is_policy, e * inv_denom, fused)


def ppo_forward(x, params, *, batch_tile=None):
    """x: (B, OBS_DIM) float32 -> (policy (B,1,N_ACTIONS), value (B,1,1))."""
    B = x.shape[0]
    # Default: single grid step (no pipeline prologue/epilogue) — right choice
    # for small/moderate B.  For large B pass a big multiple-of-8 tile (e.g.
    # 1024-4096) so per-step overhead amortizes and v7x can use both TCs.
    tb = B if batch_tile is None else batch_tile
    assert B % tb == 0
    assert tb == B or tb % 8 == 0, "partial batch tiles must be a multiple of 8"

    w1, b1, w2, b2, wp, bp, wv, bv = params

    # Fold layer2 (no activation) into the heads at trace time:
    #   h2 = h1 @ w2 + b2 ;  [logits | value] = h2 @ [wp|wv] + [bp|bv]
    #   => [logits | value] = h1 @ (w2 @ [wp|wv]) + (b2 @ [wp|wv] + [bp|bv])
    w_cat = jnp.concatenate([wp, wv], axis=1)            # (H2, NOUT)
    wh = w2 @ w_cat                                      # (H1, NOUT)
    bh = b2 @ w_cat + jnp.concatenate([bp, bv], axis=1)  # (1, NOUT)

    def fullspec(arr):
        r, c = arr.shape
        return pl.BlockSpec((r, c), lambda i: (0, 0))

    flops = 2 * B * (OBS_DIM * HIDDEN_SIZE1 + HIDDEN_SIZE1 * NOUT) + 6 * B * NOUT
    bytes_accessed = 4 * (B * OBS_DIM + OBS_DIM * HIDDEN_SIZE1 + HIDDEN_SIZE1
                          + HIDDEN_SIZE1 * NOUT + NOUT + B * NOUT)

    out = pl.pallas_call(
        ppo_fused_kernel,
        out_shape=jax.ShapeDtypeStruct((B, NOUT), jnp.float32),
        grid_spec=pltpu.PrefetchScalarGridSpec(
            num_scalar_prefetch=0,
            grid=(B // tb,),
            in_specs=[
                pl.BlockSpec((tb, OBS_DIM), lambda i: (i, 0)),
                fullspec(w1), fullspec(b1),
                fullspec(wh), fullspec(bh),
            ],
            out_specs=pl.BlockSpec((tb, NOUT), lambda i: (i, 0)),
        ),
        compiler_params=pltpu.CompilerParams(
            dimension_semantics=("parallel",)),
        cost_estimate=pl.CostEstimate(
            flops=flops,
            transcendentals=B * (N_ACTIONS + 1),
            bytes_accessed=bytes_accessed),
    )(x, w1, b1, wh, bh)

    policy = out[:, :N_ACTIONS].reshape(B, 1, N_ACTIONS)
    value = out[:, N_ACTIONS:].reshape(B, 1, 1)
    return policy, value


def init_params(key):
    """Deterministic init mimicking torch.nn.Linear (uniform +-1/sqrt(fan_in))."""
    def linear(key, fan_in, fan_out):
        kw, kb = jax.random.split(key)
        bound = 1.0 / jnp.sqrt(fan_in)
        w = jax.random.uniform(kw, (fan_in, fan_out), jnp.float32, -bound, bound)
        b = jax.random.uniform(kb, (1, fan_out), jnp.float32, -bound, bound)
        return w, b

    k1, k2, k3, k4 = jax.random.split(key, 4)
    w1, b1 = linear(k1, OBS_DIM, HIDDEN_SIZE1)
    w2, b2 = linear(k2, HIDDEN_SIZE1, HIDDEN_SIZE2)
    wp, bp = linear(k3, HIDDEN_SIZE2, N_ACTIONS)
    wv, bv = linear(k4, HIDDEN_SIZE2, 1)
    return (w1, b1, w2, b2, wp, bp, wv, bv)


def ppo_forward_ref(x, params):
    """Pure-JAX reference (unfused, matches PyTorch forward)."""
    w1, b1, w2, b2, wp, bp, wv, bv = params
    h1 = jnp.maximum(x @ w1 + b1, 0.0)
    h2 = h1 @ w2 + b2
    logits = h2 @ wp + bp
    policy = jax.nn.softmax(logits, axis=-1)
    value = h2 @ wv + bv
    B = x.shape[0]
    return policy.reshape(B, 1, N_ACTIONS), value.reshape(B, 1, 1)


if __name__ == "__main__":
    key = jax.random.PRNGKey(0)
    k_params, k_x = jax.random.split(key)

    params = init_params(k_params)
    B = 8  # small batch of CartPole observations
    x = jax.random.normal(k_x, (B, OBS_DIM), jnp.float32)

    policy, value = ppo_forward(x, params)
    jax.block_until_ready((policy, value))

    policy_ref, value_ref = ppo_forward_ref(x, params)
    assert policy.shape == (B, 1, N_ACTIONS)
    assert value.shape == (B, 1, 1)
    # policy tolerance is slightly looser: approx reciprocal (EUP) + folded-head
    # float reassociation; value only differs by reassociation.
    assert jnp.allclose(policy, policy_ref, atol=1e-3, rtol=1e-3)
    assert jnp.allclose(value, value_ref, atol=1e-4, rtol=1e-4)

    print("KERNEL_OK")
</pallas_src>

<mosaic_0001>
module attributes {stable_mosaic.version = 11 : i64} {
  func.func @ppo_fused_kernel(%arg0: i32, %arg1: memref<8x4xf32, #tpu.memory_space<vmem>>, %arg2: memref<4x64xf32, #tpu.memory_space<vmem>>, %arg3: memref<1x64xf32, #tpu.memory_space<vmem>>, %arg4: memref<64x3xf32, #tpu.memory_space<vmem>>, %arg5: memref<1x3xf32, #tpu.memory_space<vmem>>, %arg6: memref<8x3xf32, #tpu.memory_space<vmem>>) attributes {dimension_semantics = [#tpu.dimension_semantics<parallel>], iteration_bounds = array<i64: 1>, scalar_prefetch = 0 : i64, scratch_operands = 0 : i64, tpu.core_type = #tpu.core_type<tc>, window_params = [{transform_indices = @transform_0, window_bounds = array<i64: 8, 4>}, {pipeline_mode = #tpu.pipeline_mode<synchronous>, transform_indices = @transform_1, window_bounds = array<i64: 4, 64>}, {pipeline_mode = #tpu.pipeline_mode<synchronous>, transform_indices = @transform_2, window_bounds = array<i64: 1, 64>}, {pipeline_mode = #tpu.pipeline_mode<synchronous>, transform_indices = @transform_3, window_bounds = array<i64: 64, 3>}, {pipeline_mode = #tpu.pipeline_mode<synchronous>, transform_indices = @transform_4, window_bounds = array<i64: 1, 3>}, {transform_indices = @transform_5, window_bounds = array<i64: 8, 3>}]} {
    %c0 = arith.constant 0 : index
    %c0_0 = arith.constant 0 : index
    %0 = vector.load %arg1[%c0, %c0_0] : memref<8x4xf32, #tpu.memory_space<vmem>>, vector<8x4xf32>
    %c0_1 = arith.constant 0 : index
    %c0_2 = arith.constant 0 : index
    %1 = vector.load %arg2[%c0_1, %c0_2] : memref<4x64xf32, #tpu.memory_space<vmem>>, vector<4x64xf32>
    %cst = arith.constant dense<0.000000e+00> : vector<8x64xf32>
    %2 = tpu.matmul %0, %1, %cst {dimension_numbers = #tpu.dot_dimension_numbers<[1], [0], [0], [1], [0, 0, 1, 1], [], []>} : vector<8x4xf32>, vector<4x64xf32>, vector<8x64xf32> -> vector<8x64xf32>
    %c0_3 = arith.constant 0 : index
    %c0_4 = arith.constant 0 : index
    %3 = vector.load %arg3[%c0_3, %c0_4] : memref<1x64xf32, #tpu.memory_space<vmem>>, vector<1x64xf32>
    %4 = vector.broadcast %3 : vector<1x64xf32> to vector<8x64xf32>
    %5 = arith.addf %2, %4 : vector<8x64xf32>
    %cst_5 = arith.constant 0.000000e+00 : f32
    %6 = vector.broadcast %cst_5 : f32 to vector<8x64xf32>
    %7 = arith.maximumf %5, %6 : vector<8x64xf32>
    %c0_6 = arith.constant 0 : index
    %c0_7 = arith.constant 0 : index
    %8 = vector.load %arg4[%c0_6, %c0_7] : memref<64x3xf32, #tpu.memory_space<vmem>>, vector<64x3xf32>
    %cst_8 = arith.constant dense<0.000000e+00> : vector<8x3xf32>
    %9 = tpu.matmul %7, %8, %cst_8 {dimension_numbers = #tpu.dot_dimension_numbers<[1], [0], [0], [1], [0, 0, 1, 1], [], []>} : vector<8x64xf32>, vector<64x3xf32>, vector<8x3xf32> -> vector<8x3xf32>
    %c0_9 = arith.constant 0 : index
    %c0_10 = arith.constant 0 : index
    %10 = vector.load %arg5[%c0_9, %c0_10] : memref<1x3xf32, #tpu.memory_space<vmem>>, vector<1x3xf32>
    %11 = vector.broadcast %10 : vector<1x3xf32> to vector<8x3xf32>
    %12 = arith.addf %9, %11 : vector<8x3xf32>
    %13 = tpu.iota {dimensions = array<i32: 1>} : vector<8x3xi32>
    %c2_i32 = arith.constant 2 : i32
    %14 = vector.broadcast %c2_i32 : i32 to vector<8x3xi32>
    %15 = arith.cmpi slt, %13, %14 : vector<8x3xi32>
    %cst_11 = arith.constant 0xFF800000 : f32
    %16 = vector.broadcast %cst_11 : f32 to vector<8x3xf32>
    %17 = arith.select %15, %12, %16 : vector<8x3xi1>, vector<8x3xf32>
    %cst_12 = arith.constant dense<0xFF800000> : vector<8xf32>
    %18 = vector.multi_reduction <maximumf>, %17, %cst_12 [1] : vector<8x3xf32> to vector<8xf32>
    %19 = vector.shape_cast %18 : vector<8xf32> to vector<8x1xf32>
    %20 = vector.broadcast %19 : vector<8x1xf32> to vector<8x3xf32>
    %21 = arith.subf %12, %20 : vector<8x3xf32>
    %cst_13 = arith.constant 0.000000e+00 : f32
    %22 = vector.broadcast %cst_13 : f32 to vector<8x3xf32>
    %23 = arith.select %15, %21, %22 : vector<8x3xi1>, vector<8x3xf32>
    %24 = math.exp %23 : vector<8x3xf32>
    %cst_14 = arith.constant 0.000000e+00 : f32
    %25 = vector.broadcast %cst_14 : f32 to vector<8x3xf32>
    %26 = arith.select %15, %24, %25 : vector<8x3xi1>, vector<8x3xf32>
    %cst_15 = arith.constant dense<0.000000e+00> : vector<8xf32>
    %27 = vector.multi_reduction <add>, %26, %cst_15 [1] : vector<8x3xf32> to vector<8xf32>
    %28 = vector.shape_cast %27 : vector<8xf32> to vector<8x1xf32>
    %29 = tpu.reciprocal %28 {approx = true} : vector<8x1xf32> -> vector<8x1xf32>
    %30 = vector.broadcast %29 : vector<8x1xf32> to vector<8x3xf32>
    %31 = arith.mulf %26, %30 : vector<8x3xf32>
    %32 = arith.select %15, %31, %12 : vector<8x3xi1>, vector<8x3xf32>
    %c0_16 = arith.constant 0 : index
    %c0_17 = arith.constant 0 : index
    %33 = vector.load %arg6[%c0_16, %c0_17] : memref<8x3xf32, #tpu.memory_space<vmem>>, vector<8x3xf32>
    tpu.vector_store %arg6[%c0_16, %c0_17], %32 {strides = array<i32>} : memref<8x3xf32, #tpu.memory_space<vmem>>, vector<8x3xf32>,
    return
  }
  func.func @transform_0(%arg0: i32) -> (i32, i32) {
    %c0_i32 = arith.constant 0 : i32
    %c0_i32_0 = arith.constant 0 : i32
    return %arg0, %c0_i32 : i32, i32
  }
  func.func @transform_1(%arg0: i32) -> (i32, i32) {
    %c0_i32 = arith.constant 0 : i32
    %c0_i32_0 = arith.constant 0 : i32
    %c0_i32_1 = arith.constant 0 : i32
    return %c0_i32, %c0_i32_0 : i32, i32
  }
  func.func @transform_2(%arg0: i32) -> (i32, i32) {
    %c0_i32 = arith.constant 0 : i32
    %c0_i32_0 = arith.constant 0 : i32
    %c0_i32_1 = arith.constant 0 : i32
    return %c0_i32, %c0_i32_0 : i32, i32
  }
  func.func @transform_3(%arg0: i32) -> (i32, i32) {
    %c0_i32 = arith.constant 0 : i32
    %c0_i32_0 = arith.constant 0 : i32
    %c0_i32_1 = arith.constant 0 : i32
    return %c0_i32, %c0_i32_0 : i32, i32
  }
  func.func @transform_4(%arg0: i32) -> (i32, i32) {
    %c0_i32 = arith.constant 0 : i32
    %c0_i32_0 = arith.constant 0 : i32
    %c0_i32_1 = arith.constant 0 : i32
    return %c0_i32, %c0_i32_0 : i32, i32
  }
  func.func @transform_5(%arg0: i32) -> (i32, i32) {
    %c0_i32 = arith.constant 0 : i32
    %c0_i32_0 = arith.constant 0 : i32
    return %arg0, %c0_i32 : i32, i32
  }
}

</mosaic_0001>

<llo_original>
// kernel: tpu_custom_call.1
$region0: #{tpu_custom_call.1}
  #allocation0 [shape = 'u32[]', space=smem, size = 0x4, offset = 0x4, fixed_abs, tag = 'smem constant byte address 0x4 - core index']
  #allocation1 [shape = 'u32[72,128]{1,0:T(1,128)}', space=vmem, size = 0x9000, scoped, tag = 'internal scratch']
  %s0 = inlined_call_operand.vmem [shape: f32[8,4], index: 0, kind: input, shape index: {}]
  %s1 = inlined_call_operand.vmem [shape: f32[4,64], index: 1, kind: input, shape index: {}]
  %s2 = inlined_call_operand.vmem [shape: f32[1,64], index: 2, kind: input, shape index: {}]
  %s3 = inlined_call_operand.vmem [shape: f32[64,3], index: 3, kind: input, shape index: {}]
  %s4 = inlined_call_operand.vmem [shape: f32[1,3], index: 4, kind: input, shape index: {}]
  %s5 = inlined_call_operand.vmem [shape: f32[8,3], index: 5, kind: output, shape index: {}]
  %s6 = sld [smem:[#allocation0]]
  $region30: #{tpu_custom_call.1} parent=0
    _
  %s8 = ssub.s32 1, %s6
  %s9 = scalar_select 0, %s8, %s6
  // Predicated region
  $region2: #{tpu_custom_call.1} parent=0 // pred_check
    _
  $region3: #{tpu_custom_call.1} parent=0 // pred_check_branch
    %11 = sbr.rel (0) target = $region5
  $region4: #{tpu_custom_call.1} parent=0 // pred_region
    _
  $region5: #{tpu_custom_call.1} parent=0 // pred_fallthru
    _
  // Predicated region
  $region6: #{tpu_custom_call.1} parent=0 // pred_check
    _
  $region7: #{tpu_custom_call.1} parent=0 // pred_check_branch
    %13 = sbr.rel (0) target = $region9
  $region8: #{tpu_custom_call.1} parent=0 // pred_region
    _
  $region9: #{tpu_custom_call.1} parent=0 // pred_fallthru
    _
  // Predicated region
  $region10: #{tpu_custom_call.1} parent=0 // pred_check
    _
  $region11: #{tpu_custom_call.1} parent=0 // pred_check_branch
    %15 = sbr.rel (0) target = $region13
  $region12: #{tpu_custom_call.1} parent=0 // pred_region
    _
  $region13: #{tpu_custom_call.1} parent=0 // pred_fallthru
    _
  // Predicated region
  $region14: #{tpu_custom_call.1} parent=0 // pred_check
    _
  $region15: #{tpu_custom_call.1} parent=0 // pred_check_branch
    %17 = sbr.rel (0) target = $region17
  $region16: #{tpu_custom_call.1} parent=0 // pred_region
    _
  $region17: #{tpu_custom_call.1} parent=0 // pred_fallthru
    _
  // Predicated region
  $region18: #{tpu_custom_call.1} parent=0 // pred_check
    _
  $region19: #{tpu_custom_call.1} parent=0 // pred_check_branch
    %19 = sbr.rel (0) target = $region21
  $region20: #{tpu_custom_call.1} parent=0 // pred_region
    _
  $region21: #{tpu_custom_call.1} parent=0 // pred_fallthru
    _
  %v20 = vld [vmem:[%s0] sm:$0xff]
  %v21 = vld [vmem:[%s1] sm:$0xf]
  %v22 = vld [vmem:[%s2] sm:$0x1]
  %v24 = vperm.slane %v22, 0
  %vm26 = vcmask 31744
  %v28 = vsel %vm26, %v20, 0
  %vm30 = vcmask 1043456
  %v32 = vsel %vm30, %v21, 0
  %34 = vmatpush.msra.mxu0 0.0
  %35 = vmatpush.msra.mxu0 0.0
  %36 = vmatpush.msra.mxu0 0.0
  %37 = vmatpush.msra.mxu0 0.0
  %38 = vmatpush.msra.mxu0 0.0
  %39 = vmatpush.msra.mxu0 0.0
  %40 = vmatpush.msra.mxu0 0.0
  %41 = vmatpush.msra.mxu0 0.0
  %42 = vmatpush.msra.mxu0 0.0
  %43 = vmatpush.msra.mxu0 0.0
  %44 = vmatpush.msra.mxu0 0.0
  %45 = vmatpush.msra.mxu0 0.0
  %46 = vmatpush.msra.mxu0 0.0
  %47 = vmatpush.msra.mxu0 0.0
  %48 = vmatpush.msra.mxu0 0.0
  %49 = vmatpush.msra.mxu0 %v32
  %50 = vmatmul.f32.gmra.mxu0 %v28
  %v51 = vpop.f32.mrf.mxu0
  %v52 = vadd.f32 %v24, %v51
  %53 = vdwg.mxu0
  %v54 = vmax.f32 %v52, 0.0
  %v55 = vld [vmem:[%s3] sm:$0xff]
  %v56 = vld [vmem:[%s3 + $0x8] sm:$0xff]
  %v57 = vld [vmem:[%s3 + $0x10] sm:$0xff]
  %v58 = vld [vmem:[%s3 + $0x18] sm:$0xff]
  %v59 = vld [vmem:[%s3 + $0x20] sm:$0xff]
  %v60 = vld [vmem:[%s3 + $0x28] sm:$0xff]
  %v61 = vld [vmem:[%s3 + $0x30] sm:$0xff]
  %v62 = vld [vmem:[%s3 + $0x38] sm:$0xff]
  %v63 = vld [vmem:[%s4] sm:$0x1]
  %v65 = vperm.slane %v63, 0
  %vm67 = vcmask 523264
  %v69 = vsel %vm67, %v54, 0
  %71 = vmatpush.msra.mxu0 0.0
  %72 = vmatpush.msra.mxu0 0.0
  %73 = vmatpush.msra.mxu0 0.0
  %74 = vmatpush.msra.mxu0 0.0
  %75 = vmatpush.msra.mxu0 0.0
  %76 = vmatpush.msra.mxu0 0.0
  %77 = vmatpush.msra.mxu0 0.0
  %78 = vmatpush.msra.mxu0 0.0
  %79 = vmatpush.msra.mxu0 %v62
  %80 = vmatpush.msra.mxu0 %v61
  %81 = vmatpush.msra.mxu0 %v60
  %82 = vmatpush.msra.mxu0 %v59
  %83 = vmatpush.msra.mxu0 %v58
  %84 = vmatpush.msra.mxu0 %v57
  %85 = vmatpush.msra.mxu0 %v56
  %86 = vmatpush.msra.mxu0 %v55
  %87 = vmatmul.f32.gmra.mxu0 %v69
  %v88 = vpop.f32.mrf.mxu0
  %v89 = vadd.f32 %v65, %v88
  %90 = vdwg.mxu0
  %v91 = vlaneseq
  %v92 = vand.u32 %v91, 127
  %vm93 = vcmp.lt.s32.totalorder %v92, 2
  %v94 = vsel %vm93, %v89, -inf
  %vm95 = vcmask 23552
  %v96 = vsel %vm95, %v94, -inf
  %97 = vmax.xlane.f32.xlu0 %v96
  %v98 = vpop.xlane.xlu0 %97
  %v99 = vsub.f32 %v89, %v98
  %v100 = vsel %vm93, %v99, 0.0
  %v101 = vmul.f32 %v100, 1.442695
  %v102 = vpow.pop %v101
  %v103 = vsel %vm93, %v102, 0.0
  %v104 = vsel %vm95, %v103, 0.0
  %105 = vadd.xlane.f32.xlu0 %v104
  %v106 = vpop.xlane.xlu0 %105
  %v107 = vrcp.pop %v106
  %v108 = vmul.f32 %v103, %v107
  %v109 = vsel %vm93, %v108, %v89
  %110 = vst.msk [vmem:[%s5] sm:$0xff] %vm95, %v109
  // Predicated region
  $region22: #{tpu_custom_call.1} parent=0 // pred_check
    _
  $region23: #{tpu_custom_call.1} parent=0 // pred_check_branch
    %112 = sbr.rel (0) target = $region25
  $region24: #{tpu_custom_call.1} parent=0 // pred_region
    _
  $region25: #{tpu_custom_call.1} parent=0 // pred_fallthru
    _
  // Predicated region
  $region26: #{tpu_custom_call.1} parent=0 // pred_check
    _
  $region27: #{tpu_custom_call.1} parent=0 // pred_check_branch
    %114 = sbr.rel (0) target = $region29
  $region28: #{tpu_custom_call.1} parent=0 // pred_region
    _
  $region29: #{tpu_custom_call.1} parent=0 // pred_fallthru
    _

</llo_original>
